<compile_context>
chip_gen: v5e
topology: v5e:2x2
jax: 0.10.0
libtpu: 0.0.40
codegen_flags: <defaults>
</compile_context>

<pallas_src>
import jax
import jax.numpy as jnp
from jax.experimental import pallas as pl
from jax.experimental.pallas import tpu as pltpu


def _ffn_kernel(x_ref, w1_ref, b1_ref, w2_ref, b2_ref, o_ref, acc_ref):
    k = pl.program_id(1)

    @pl.when(k == 0)
    def _():
        acc_ref[...] = jnp.zeros_like(acc_ref)

    f_tile = w1_ref.shape[1]                      # static chunk width of d_ff
    start = pl.multiple_of(k * f_tile, 128)

    # First linear: (row_tile, dm_p) @ (dm_p, f_tile) -> f32 accumulation.
    h = jnp.dot(x_ref[...], w1_ref[...], preferred_element_type=jnp.float32)
    h = h + b1_ref[:, pl.ds(start, f_tile)]       # b1 is resident; slice the chunk
    # "gelu" attribute in the reference module is actually nn.ReLU()
    h = jnp.maximum(h, 0.0)
    # TODO(synk): dropout is identity in eval mode; training-mode dropout
    # (pltpu.prng_seed + prng_random_bits mask + 1/(1-p) scale) is not applied.

    # Second linear (partial over this d_ff chunk), accumulated in f32.
    acc_ref[...] += jnp.dot(h.astype(w2_ref.dtype), w2_ref[...],
                            preferred_element_type=jnp.float32)

    @pl.when(k == pl.num_programs(1) - 1)
    def _():
        o_ref[...] = (acc_ref[...] + b2_ref[...]).astype(o_ref.dtype)


def _round_up(x, m):
    return ((x + m - 1) // m) * m


def _default_budget_and_row_tile():
    """Pick a VMEM budget / default row tile from the TPU generation."""
    kind = jax.devices()[0].device_kind.lower()
    if ("v4" in kind) or ("v5" in kind) or ("v6" in kind):
        # 128 MiB physical VMEM generations.
        return 96 * 1024 * 1024, 1024
    # v7x (64 MiB physical VMEM) or unknown: stay conservative.
    return 52 * 1024 * 1024, 512


def positionwise_ffn(x, w1, b1, w2, b2, *, row_tile=None, f_tile=1024,
                     compute_dtype=None, vmem_limit_bytes=None):
    """x: (B, S, d_model).  w1: (d_model, d_ff), b1: (d_ff,),
    w2: (d_ff, d_model), b2: (d_model,).  Weights are nn.Linear weights
    pre-transposed to (in, out).

    compute_dtype: optionally cast operands (e.g. jnp.bfloat16) for the
    MXU-native path; accumulation is always f32 and the output keeps x's
    original dtype.
    """
    out_dtype = x.dtype
    if compute_dtype is not None:
        x = x.astype(compute_dtype)
        w1 = w1.astype(compute_dtype)
        b1 = b1.astype(compute_dtype)
        w2 = w2.astype(compute_dtype)
        b2 = b2.astype(compute_dtype)

    B, S, d_model = x.shape
    d_ff = w1.shape[1]
    M = B * S

    budget, default_row_tile = _default_budget_and_row_tile()
    if vmem_limit_bytes is None:
        vmem_limit_bytes = budget
    else:
        budget = vmem_limit_bytes
    if row_tile is None:
        row_tile = default_row_tile

    # --- derive padded / effective tile sizes -------------------------------
    row_tile = _round_up(max(row_tile, 8), 8)
    f_tile = _round_up(max(f_tile, 128), 128)

    # dm_p: lane-dense, 128-aligned; prefer 256-aligned (2x256x256 MXU on
    # v6e/v7x) when the extra padding is cheap (<= 12.5%).
    dm_128 = _round_up(d_model, 128)
    dm_256 = _round_up(d_model, 256)
    dm_p = dm_256 if (dm_256 - dm_128) * 8 <= dm_128 else dm_128

    m_round = _round_up(M, 8)
    row_tile_eff = min(row_tile, m_round)
    # Megacore: make sure there are >= 2 row tiles whenever M allows, so the
    # "parallel" row axis actually shards across both TensorCores (v7x).
    if m_round // row_tile_eff < 2 and m_round >= 16:
        row_tile_eff = _round_up((m_round + 1) // 2, 8)

    df_round = _round_up(d_ff, 128)
    f_tile_eff = min(f_tile, df_round)

    in_itemsize = jnp.dtype(x.dtype).itemsize
    out_itemsize = jnp.dtype(out_dtype).itemsize

    def _df_p(ft):
        return _round_up(d_ff, ft)

    def _vmem_use(rt, ft, dfp, wbuf):
        return (2 * rt * dm_p * in_itemsize            # x (double-buffered)
                + wbuf * dm_p * ft * in_itemsize       # W1 blocks
                + wbuf * ft * dm_p * in_itemsize       # W2 blocks
                + 2 * dfp * in_itemsize                # b1 (resident)
                + 2 * dm_p * in_itemsize               # b2
                + 2 * rt * dm_p * out_itemsize         # out (double-buffered)
                + rt * dm_p * 4)                       # f32 accumulator scratch

    df_p = _df_p(f_tile_eff)

    # --- fit the tiles into the per-generation VMEM budget -------------------
    # 3-deep weight buffering only when it fits and there are >= 3 k-steps.
    wbuf = 3
    if df_p // f_tile_eff < 3 or _vmem_use(row_tile_eff, f_tile_eff, df_p, 3) > budget:
        wbuf = 2
    # Shrink f_tile first (down to 256) — it only affects per-step overhead.
    while _vmem_use(row_tile_eff, f_tile_eff, df_p, wbuf) > budget and f_tile_eff > 256:
        f_tile_eff = _round_up(max(256, f_tile_eff // 2), 128)
        df_p = _df_p(f_tile_eff)
    # Then shrink row_tile (this re-streams weights more often — last resort).
    while _vmem_use(row_tile_eff, f_tile_eff, df_p, wbuf) > budget and row_tile_eff > 256:
        row_tile_eff = _round_up(max(256, row_tile_eff // 2), 8)
    # Final fallbacks.
    while _vmem_use(row_tile_eff, f_tile_eff, df_p, wbuf) > budget and f_tile_eff > 128:
        f_tile_eff = _round_up(max(128, f_tile_eff // 2), 128)
        df_p = _df_p(f_tile_eff)
    while _vmem_use(row_tile_eff, f_tile_eff, df_p, wbuf) > budget and row_tile_eff > 8:
        row_tile_eff = _round_up(max(8, row_tile_eff // 2), 8)

    M_p = _round_up(M, row_tile_eff)

    # --- zero-pad operands only when needed (padding contributes zero) -------
    # TODO(synk): for repeated calls, pre-pad w1/b1/w2/b2 once at init instead
    # of per call; here we at least skip the pads when already aligned.
    x2 = x.reshape(M, d_model)
    if M_p != M or dm_p != d_model:
        x2 = jnp.pad(x2, ((0, M_p - M), (0, dm_p - d_model)))
    w1p = w1 if (dm_p == d_model and df_p == d_ff) else \
        jnp.pad(w1, ((0, dm_p - d_model), (0, df_p - d_ff)))
    b1p = (b1 if df_p == d_ff else jnp.pad(b1, (0, df_p - d_ff))).reshape(1, df_p)
    w2p = w2 if (df_p == d_ff and dm_p == d_model) else \
        jnp.pad(w2, ((0, df_p - d_ff), (0, dm_p - d_model)))
    b2p = (b2 if dm_p == d_model else jnp.pad(b2, (0, dm_p - d_model))).reshape(1, dm_p)

    grid = (M_p // row_tile_eff, df_p // f_tile_eff)
    n_row_tiles = grid[0]

    # --- cost estimate: include per-row-tile weight re-streaming -------------
    cost = pl.CostEstimate(
        flops=4 * M_p * dm_p * df_p,                   # two matmuls, 2 flops/MAC
        transcendentals=0,
        bytes_accessed=int(
            x2.size * in_itemsize
            + n_row_tiles * (w1p.size + w2p.size) * in_itemsize
            + (b1p.size + b2p.size) * in_itemsize
            + M_p * dm_p * out_itemsize),
    )

    # --- block specs ----------------------------------------------------------
    if wbuf > 2:
        w1_spec = pl.BlockSpec((dm_p, f_tile_eff), lambda i, k: (0, k),
                               pipeline_mode=pl.Buffered(wbuf))
        w2_spec = pl.BlockSpec((f_tile_eff, dm_p), lambda i, k: (k, 0),
                               pipeline_mode=pl.Buffered(wbuf))
    else:
        w1_spec = pl.BlockSpec((dm_p, f_tile_eff), lambda i, k: (0, k))
        w2_spec = pl.BlockSpec((f_tile_eff, dm_p), lambda i, k: (k, 0))

    out2 = pl.pallas_call(
        _ffn_kernel,
        out_shape=jax.ShapeDtypeStruct((M_p, dm_p), out_dtype),
        grid_spec=pltpu.PrefetchScalarGridSpec(
            num_scalar_prefetch=0,
            grid=grid,
            in_specs=[
                pl.BlockSpec((row_tile_eff, dm_p), lambda i, k: (i, 0)),  # x rows
                w1_spec,                                                  # W1 chunk
                pl.BlockSpec((1, df_p), lambda i, k: (0, 0)),             # b1 resident
                w2_spec,                                                  # W2 chunk
                pl.BlockSpec((1, dm_p), lambda i, k: (0, 0)),             # b2
            ],
            out_specs=pl.BlockSpec((row_tile_eff, dm_p), lambda i, k: (i, 0)),
            scratch_shapes=[pltpu.VMEM((row_tile_eff, dm_p), jnp.float32)],
        ),
        compiler_params=pltpu.CompilerParams(
            dimension_semantics=("parallel", "arbitrary"),
            vmem_limit_bytes=vmem_limit_bytes,
        ),
        cost_estimate=cost,
    )(x2, w1p, b1p, w2p, b2p)

    return out2[:M, :d_model].reshape(B, S, d_model)


def _ref_ffn(x, w1, b1, w2, b2):
    h = jnp.maximum(jnp.einsum("bsd,df->bsf", x, w1) + b1, 0.0)
    return jnp.einsum("bsf,fd->bsd", h, w2) + b2


if __name__ == "__main__":
    # Small shapes consistent with the module: batch=2, seq=8, d_model=32, d_ff=64
    B, S, d_model, d_ff = 2, 8, 32, 64
    key = jax.random.PRNGKey(0)
    kx, k1, kb1, k2, kb2 = jax.random.split(key, 5)

    x = jax.random.normal(kx, (B, S, d_model), dtype=jnp.float32)
    # nn.Linear-style parameters, pre-transposed to (in, out)
    w1 = jax.random.normal(k1, (d_model, d_ff), dtype=jnp.float32) * 0.1
    b1 = jax.random.normal(kb1, (d_ff,), dtype=jnp.float32) * 0.1
    w2 = jax.random.normal(k2, (d_ff, d_model), dtype=jnp.float32) * 0.1
    b2 = jax.random.normal(kb2, (d_model,), dtype=jnp.float32) * 0.1

    ref = _ref_ffn(x, w1, b1, w2, b2)

    # f32 path (tight tolerance)
    out = positionwise_ffn(x, w1, b1, w2, b2)
    out = jax.block_until_ready(out)
    assert out.shape == (B, S, d_model)
    assert jnp.allclose(out, ref, atol=1e-4, rtol=1e-4)

    # bf16 operands / f32 accumulation path (MXU-native; loose tolerance)
    out_bf16 = positionwise_ffn(
        x.astype(jnp.bfloat16), w1.astype(jnp.bfloat16), b1.astype(jnp.bfloat16),
        w2.astype(jnp.bfloat16), b2.astype(jnp.bfloat16))
    out_bf16 = jax.block_until_ready(out_bf16)
    assert out_bf16.shape == (B, S, d_model)
    assert jnp.allclose(out_bf16.astype(jnp.float32), ref, atol=1e-1, rtol=1e-1)

    # f32 inputs, bf16 compute path via compute_dtype (output stays f32)
    out_cd = positionwise_ffn(x, w1, b1, w2, b2, compute_dtype=jnp.bfloat16)
    out_cd = jax.block_until_ready(out_cd)
    assert out_cd.shape == (B, S, d_model)
    assert out_cd.dtype == jnp.float32
    assert jnp.allclose(out_cd, ref, atol=1e-1, rtol=1e-1)

    print("KERNEL_OK")
</pallas_src>

<mosaic_0001>
module attributes {stable_mosaic.version = 11 : i64} {
  func.func @_ffn_kernel(%arg0: i32, %arg1: i32, %arg2: memref<8x128xf32, #tpu.memory_space<vmem>>, %arg3: memref<128x128xf32, #tpu.memory_space<vmem>>, %arg4: memref<1x128xf32, #tpu.memory_space<vmem>>, %arg5: memref<128x128xf32, #tpu.memory_space<vmem>>, %arg6: memref<1x128xf32, #tpu.memory_space<vmem>>, %arg7: memref<8x128xf32, #tpu.memory_space<vmem>>, %arg8: memref<8x128xf32, #tpu.memory_space<vmem>>) attributes {dimension_semantics = [#tpu.dimension_semantics<parallel>, #tpu.dimension_semantics<arbitrary>], iteration_bounds = array<i64: 2, 1>, scalar_prefetch = 0 : i64, scratch_operands = 1 : i64, tpu.core_type = #tpu.core_type<tc>, window_params = [{transform_indices = @transform_0, window_bounds = array<i64: 8, 128>}, {transform_indices = @transform_1, window_bounds = array<i64: 128, 128>}, {pipeline_mode = #tpu.pipeline_mode<synchronous>, transform_indices = @transform_2, window_bounds = array<i64: 1, 128>}, {transform_indices = @transform_3, window_bounds = array<i64: 128, 128>}, {pipeline_mode = #tpu.pipeline_mode<synchronous>, transform_indices = @transform_4, window_bounds = array<i64: 1, 128>}, {transform_indices = @transform_5, window_bounds = array<i64: 8, 128>}]} {
    %c0_i32 = arith.constant 0 : i32
    %0 = arith.cmpi eq, %arg1, %c0_i32 : i32
    %1 = arith.extui %0 : i1 to i32
    %c0_i32_0 = arith.constant 0 : i32
    %2 = arith.cmpi ne, %1, %c0_i32_0 : i32
    scf.if %2 {
      %cst_15 = arith.constant 0.000000e+00 : f32
      %22 = vector.broadcast %cst_15 : f32 to vector<8x128xf32>
      %c0_16 = arith.constant 0 : index
      %c0_17 = arith.constant 0 : index
      %23 = vector.load %arg8[%c0_16, %c0_17] : memref<8x128xf32, #tpu.memory_space<vmem>>, vector<8x128xf32>
      tpu.vector_store %arg8[%c0_16, %c0_17], %22 {strides = array<i32>} : memref<8x128xf32, #tpu.memory_space<vmem>>, vector<8x128xf32>,
    } else {
    }
    %c128_i32 = arith.constant 128 : i32
    %3 = arith.muli %arg1, %c128_i32 : i32
    %4 = tpu.assume_multiple %3, 128 : i32
    %c0 = arith.constant 0 : index
    %c0_1 = arith.constant 0 : index
    %5 = vector.load %arg2[%c0, %c0_1] : memref<8x128xf32, #tpu.memory_space<vmem>>, vector<8x128xf32>
    %c0_2 = arith.constant 0 : index
    %c0_3 = arith.constant 0 : index
    %6 = vector.load %arg3[%c0_2, %c0_3] : memref<128x128xf32, #tpu.memory_space<vmem>>, vector<128x128xf32>
    %cst = arith.constant dense<0.000000e+00> : vector<8x128xf32>
    %7 = tpu.matmul %5, %6, %cst {dimension_numbers = #tpu.dot_dimension_numbers<[1], [0], [0], [1], [0, 0, 1, 1], [], []>} : vector<8x128xf32>, vector<128x128xf32>, vector<8x128xf32> -> vector<8x128xf32>
    %c0_4 = arith.constant 0 : index
    %8 = arith.index_cast %4 : i32 to index
    %9 = vector.load %arg4[%c0_4, %8] : memref<1x128xf32, #tpu.memory_space<vmem>>, vector<1x128xf32>
    %10 = vector.broadcast %9 : vector<1x128xf32> to vector<8x128xf32>
    %11 = arith.addf %7, %10 : vector<8x128xf32>
    %cst_5 = arith.constant 0.000000e+00 : f32
    %12 = vector.broadcast %cst_5 : f32 to vector<8x128xf32>
    %13 = arith.maximumf %11, %12 : vector<8x128xf32>
    %c0_6 = arith.constant 0 : index
    %c0_7 = arith.constant 0 : index
    %14 = vector.load %arg8[%c0_6, %c0_7] : memref<8x128xf32, #tpu.memory_space<vmem>>, vector<8x128xf32>
    %c0_8 = arith.constant 0 : index
    %c0_9 = arith.constant 0 : index
    %15 = vector.load %arg5[%c0_8, %c0_9] : memref<128x128xf32, #tpu.memory_space<vmem>>, vector<128x128xf32>
    %cst_10 = arith.constant dense<0.000000e+00> : vector<8x128xf32>
    %16 = tpu.matmul %13, %15, %cst_10 {dimension_numbers = #tpu.dot_dimension_numbers<[1], [0], [0], [1], [0, 0, 1, 1], [], []>} : vector<8x128xf32>, vector<128x128xf32>, vector<8x128xf32> -> vector<8x128xf32>
    %17 = arith.addf %14, %16 : vector<8x128xf32>
    %c0_11 = arith.constant 0 : index
    %c0_12 = arith.constant 0 : index
    %18 = vector.load %arg8[%c0_11, %c0_12] : memref<8x128xf32, #tpu.memory_space<vmem>>, vector<8x128xf32>
    tpu.vector_store %arg8[%c0_11, %c0_12], %17 {strides = array<i32>} : memref<8x128xf32, #tpu.memory_space<vmem>>, vector<8x128xf32>,
    %c0_i32_13 = arith.constant 0 : i32
    %19 = arith.cmpi eq, %arg1, %c0_i32_13 : i32
    %20 = arith.extui %19 : i1 to i32
    %c0_i32_14 = arith.constant 0 : i32
    %21 = arith.cmpi ne, %20, %c0_i32_14 : i32
    scf.if %21 {
      %c0_15 = arith.constant 0 : index
      %c0_16 = arith.constant 0 : index
      %22 = vector.load %arg8[%c0_15, %c0_16] : memref<8x128xf32, #tpu.memory_space<vmem>>, vector<8x128xf32>
      %c0_17 = arith.constant 0 : index
      %c0_18 = arith.constant 0 : index
      %23 = vector.load %arg6[%c0_17, %c0_18] : memref<1x128xf32, #tpu.memory_space<vmem>>, vector<1x128xf32>
      %24 = vector.broadcast %23 : vector<1x128xf32> to vector<8x128xf32>
      %25 = arith.addf %22, %24 : vector<8x128xf32>
      %c0_19 = arith.constant 0 : index
      %c0_20 = arith.constant 0 : index
      %26 = vector.load %arg7[%c0_19, %c0_20] : memref<8x128xf32, #tpu.memory_space<vmem>>, vector<8x128xf32>
      tpu.vector_store %arg7[%c0_19, %c0_20], %25 {strides = array<i32>} : memref<8x128xf32, #tpu.memory_space<vmem>>, vector<8x128xf32>,
    } else {
    }
    return
  }
  func.func @transform_0(%arg0: i32, %arg1: i32) -> (i32, i32) {
    %c0_i32 = arith.constant 0 : i32
    %c0_i32_0 = arith.constant 0 : i32
    return %arg0, %c0_i32 : i32, i32
  }
  func.func @transform_1(%arg0: i32, %arg1: i32) -> (i32, i32) {
    %c0_i32 = arith.constant 0 : i32
    %c0_i32_0 = arith.constant 0 : i32
    return %c0_i32, %arg1 : i32, i32
  }
  func.func @transform_2(%arg0: i32, %arg1: i32) -> (i32, i32) {
    %c0_i32 = arith.constant 0 : i32
    %c0_i32_0 = arith.constant 0 : i32
    %c0_i32_1 = arith.constant 0 : i32
    return %c0_i32, %c0_i32_0 : i32, i32
  }
  func.func @transform_3(%arg0: i32, %arg1: i32) -> (i32, i32) {
    %c0_i32 = arith.constant 0 : i32
    %c0_i32_0 = arith.constant 0 : i32
    return %arg1, %c0_i32 : i32, i32
  }
  func.func @transform_4(%arg0: i32, %arg1: i32) -> (i32, i32) {
    %c0_i32 = arith.constant 0 : i32
    %c0_i32_0 = arith.constant 0 : i32
    %c0_i32_1 = arith.constant 0 : i32
    return %c0_i32, %c0_i32_0 : i32, i32
  }
  func.func @transform_5(%arg0: i32, %arg1: i32) -> (i32, i32) {
    %c0_i32 = arith.constant 0 : i32
    %c0_i32_0 = arith.constant 0 : i32
    return %arg0, %c0_i32 : i32, i32
  }
}

</mosaic_0001>

<llo_original>
// kernel: tpu_custom_call.1
$region0: #{tpu_custom_call.1}
  #allocation0 [shape = 'u32[]', space=smem, size = 0x4, offset = 0x4, fixed_abs, tag = 'smem constant byte address 0x4 - core index']
  #allocation1 [shape = 'u32[72,128]{1,0:T(1,128)}', space=vmem, size = 0x9000, scoped, tag = 'internal scratch']
  #allocation2 [shape = 'f32[8,128]{1,0:T(8,128)}', space=vmem, size = 0x1000, scoped, tag = 'scratch operand']
  %s0 = inlined_call_operand.hbm [shape: f32[16,128], index: 0, kind: input, shape index: {}]
  %s1 = inlined_call_operand.hbm [shape: f32[128,128], index: 1, kind: input, shape index: {}]
  %s2 = inlined_call_operand.vmem [shape: f32[1,128], index: 2, kind: input, shape index: {}]
  %s3 = inlined_call_operand.hbm [shape: f32[128,128], index: 3, kind: input, shape index: {}]
  %s4 = inlined_call_operand.vmem [shape: f32[1,128], index: 4, kind: input, shape index: {}]
  %s5 = inlined_call_operand.hbm [shape: f32[16,128], index: 5, kind: output, shape index: {}]
  %s6 = sld [smem:[#allocation0]]
  $region73: #{tpu_custom_call.1} parent=0
    _
  %s8 = ssub.s32 1, %s6
  %s9 = scalar_select 0, %s8, %s6
  $region1: #{tpu_custom_call.1} parent=0
    #allocation3 [shape = 'u8[8192]{0}', space=vmem, size = 0x2000, scoped, tag = 'input window, operand 0']
    #allocation4 [shape = 's32[2]{0}', space=sflag, size = 0x8, scoped, tag = 'scoped memory for tpu_custom_call.1']
    #allocation5 [shape = 's32[2]{0}', space=sflag, size = 0x8, scoped, tag = 'scoped memory for tpu_custom_call.1']
    #allocation6 [shape = 'u8[65536]{0}', space=vmem, size = 0x10000, scoped, tag = 'input window, operand 1, single buffered']
    #allocation7 [shape = 's32[1]{0}', space=sflag, size = 0x4, scoped, tag = 'scoped memory for tpu_custom_call.1']
    #allocation8 [shape = 'u8[65536]{0}', space=vmem, size = 0x10000, scoped, tag = 'input window, operand 3, single buffered']
    #allocation9 [shape = 'u8[8192]{0}', space=vmem, size = 0x2000, scoped, tag = 'output window, operand 0']
    %10 = vsyncpa [#allocation4], 0
    %s11 = scalar_lea.sflag [#allocation4], 1
    %12 = vsyncpa %s11, 0
    %13 = vsyncpa [#allocation7], 0
    %14 = vsyncpa [#allocation5], 0
    %s15 = scalar_lea.sflag [#allocation5], 1
    %16 = vsyncpa %s15, 0
    loop: start=0, step=1, limit=4
    $region2: #{tpu_custom_call.1} parent=1 // loop_pre_header
      _
    $region3: #{tpu_custom_call.1} parent=1 // loop_header
      %s18 = sphi 0, %s22
      %p19 = scmp.ge.s32.totalorder %s18, 4
      %s25 = sphi 0, %s37
      %s26 = sphi 0, %s33
      %s27 = sphi 0, %s25
      %s28 = sphi 0, %s26
      %s29 = sphi 0, %s27
      %s30 = sphi 0, %s28
      %s40 = sphi 0, %s42
      %s43 = sphi 0, %s40
      %s44 = sphi 0, %s43
      %s60 = sphi 0, %s44
      %s66 = sphi 0, %s68
      %s69 = sphi 0, %s66
      %s70 = sphi 0, %s69
      %s86 = sphi 0, %s70
      %s90 = sphi 0, %s90
      %s92 = sphi 0, %s90
      %s93 = sphi 0, %s92
      %s107 = sphi 0, %s93
      %s113 = sphi 0, %s115
      %s116 = sphi 0, %s113
      %s117 = sphi 0, %s116
      %s133 = sphi 0, %s117
      %s137 = sphi 0, %s137
      %s139 = sphi 0, %s137
      %s140 = sphi 0, %s139
      %s154 = sphi 0, %s140
      %s160 = sphi 0, %s162
      %s163 = sphi 0, %s160
      %s164 = sphi 0, %s163
      %s180 = sphi 0, %s164
    $region4: #{tpu_custom_call.1} parent=1 // loop_header_branch
      %21 = sbr.rel (%p19) target = $region8
    $region5: #{tpu_custom_call.1} parent=1 // loop_body
      %s23 = ssub.s32 %s18, 1
      %s24 = ssub.s32 %s18, 2
      %s31 = sadd.s32 1, %s26
      %p32 = scmp.ge.s32.totalorder %s31, 1
      %s33 = scalar_select %p32, 0, %s31
      %s34 = sadd.s32 1, %s25
      %s35 = scalar_select %p32, %s34, %s25
      %p36 = scmp.ge.s32.totalorder %s35, 2
      %s37 = scalar_select %p36, 0, %s35
      %s38 = ssub.s32 %s25, %s37
      %p39 = scmp.eq.s32.totalorder %s38, 0
      %s41 = sadd.s32 %s40, 1
      %s42 = scalar_select %p39, %s40, %s41
      %p45 = pneg %p39
      %p46 = scmp.eq.s32.totalorder %s18, 1
      %p47 = por %p45, %p46
      %p48 = scmp.ne.s32.totalorder %s40, %s43
      %p49 = scmp.eq.s32.totalorder %s18, 0
      %p50 = por %p48, %p49
      %p51 = scmp.ne.s32.totalorder %s40, %s43
      %p52 = scmp.eq.s32.totalorder %s23, 1
      %p53 = por %p51, %p52
      %p54 = scmp.ne.s32.totalorder %s43, %s44
      %p55 = scmp.eq.s32.totalorder %s23, 0
      %p56 = por %p54, %p55
      %p57 = scmp.ne.s32.totalorder %s43, %s44
      %p58 = scmp.eq.s32.totalorder %s24, 1
      %p59 = por %p57, %p58
      %p61 = scmp.ne.s32.totalorder %s44, %s60
      %p62 = scmp.eq.s32.totalorder %s24, 0
      %p63 = por %p61, %p62
      %s64 = ssub.s32 %s26, %s33
      %p65 = scmp.eq.s32.totalorder %s64, 0
      %s67 = sadd.s32 %s66, 1
      %s68 = scalar_select %p65, %s66, %s67
      %p71 = pneg %p65
      %p72 = scmp.eq.s32.totalorder %s18, 1
      %p73 = por %p71, %p72
      %p74 = scmp.ne.s32.totalorder %s66, %s69
      %p75 = scmp.eq.s32.totalorder %s18, 0
      %p76 = por %p74, %p75
      %p77 = scmp.ne.s32.totalorder %s66, %s69
      %p78 = scmp.eq.s32.totalorder %s23, 1
      %p79 = por %p77, %p78
      %p80 = scmp.ne.s32.totalorder %s69, %s70
      %p81 = scmp.eq.s32.totalorder %s23, 0
      %p82 = por %p80, %p81
      %p83 = scmp.ne.s32.totalorder %s69, %s70
      %p84 = scmp.eq.s32.totalorder %s24, 1
      %p85 = por %p83, %p84
      %p87 = scmp.ne.s32.totalorder %s70, %s86
      %p88 = scmp.eq.s32.totalorder %s24, 0
      %p89 = por %p87, %p88
      %s91 = sadd.s32 %s90, 1
      %p94 = scmp.eq.s32.totalorder %s18, 1
      %p95 = scmp.ne.s32.totalorder %s90, %s92
      %p96 = scmp.eq.s32.totalorder %s18, 0
      %p97 = por %p95, %p96
      %p98 = scmp.ne.s32.totalorder %s90, %s92
      %p99 = scmp.eq.s32.totalorder %s23, 1
      %p100 = por %p98, %p99
      %p101 = scmp.ne.s32.totalorder %s92, %s93
      %p102 = scmp.eq.s32.totalorder %s23, 0
      %p103 = por %p101, %p102
      %p104 = scmp.ne.s32.totalorder %s92, %s93
      %p105 = scmp.eq.s32.totalorder %s24, 1
      %p106 = por %p104, %p105
      %p108 = scmp.ne.s32.totalorder %s93, %s107
      %p109 = scmp.eq.s32.totalorder %s24, 0
      %p110 = por %p108, %p109
      %s111 = ssub.s32 %s26, %s33
      %p112 = scmp.eq.s32.totalorder %s111, 0
      %s114 = sadd.s32 %s113, 1
      %s115 = scalar_select %p112, %s113, %s114
      %p118 = pneg %p112
      %p119 = scmp.eq.s32.totalorder %s18, 1
      %p120 = por %p118, %p119
      %p121 = scmp.ne.s32.totalorder %s113, %s116
      %p122 = scmp.eq.s32.totalorder %s18, 0
      %p123 = por %p121, %p122
      %p124 = scmp.ne.s32.totalorder %s113, %s116
      %p125 = scmp.eq.s32.totalorder %s23, 1
      %p126 = por %p124, %p125
      %p127 = scmp.ne.s32.totalorder %s116, %s117
      %p128 = scmp.eq.s32.totalorder %s23, 0
      %p129 = por %p127, %p128
      %p130 = scmp.ne.s32.totalorder %s116, %s117
      %p131 = scmp.eq.s32.totalorder %s24, 1
      %p132 = por %p130, %p131
      %p134 = scmp.ne.s32.totalorder %s117, %s133
      %p135 = scmp.eq.s32.totalorder %s24, 0
      %p136 = por %p134, %p135
      %s138 = sadd.s32 %s137, 1
      %p141 = scmp.eq.s32.totalorder %s18, 1
      %p142 = scmp.ne.s32.totalorder %s137, %s139
      %p143 = scmp.eq.s32.totalorder %s18, 0
      %p144 = por %p142, %p143
      %p145 = scmp.ne.s32.totalorder %s137, %s139
      %p146 = scmp.eq.s32.totalorder %s23, 1
      %p147 = por %p145, %p146
      %p148 = scmp.ne.s32.totalorder %s139, %s140
      %p149 = scmp.eq.s32.totalorder %s23, 0
      %p150 = por %p148, %p149
      %p151 = scmp.ne.s32.totalorder %s139, %s140
      %p152 = scmp.eq.s32.totalorder %s24, 1
      %p153 = por %p151, %p152
      %p155 = scmp.ne.s32.totalorder %s140, %s154
      %p156 = scmp.eq.s32.totalorder %s24, 0
      %p157 = por %p155, %p156
      %s158 = ssub.s32 %s25, %s37
      %p159 = scmp.eq.s32.totalorder %s158, 0
      %s161 = sadd.s32 %s160, 1
      %s162 = scalar_select %p159, %s160, %s161
      %p165 = pneg %p159
      %p166 = scmp.eq.s32.totalorder %s18, 1
      %p167 = por %p165, %p166
      %p168 = scmp.ne.s32.totalorder %s160, %s163
      %p169 = scmp.eq.s32.totalorder %s18, 0
      %p170 = por %p168, %p169
      %p171 = scmp.ne.s32.totalorder %s160, %s163
      %p172 = scmp.eq.s32.totalorder %s23, 1
      %p173 = por %p171, %p172
      %p174 = scmp.ne.s32.totalorder %s163, %s164
      %p175 = scmp.eq.s32.totalorder %s23, 0
      %p176 = por %p174, %p175
      %p177 = scmp.ne.s32.totalorder %s163, %s164
      %p178 = scmp.eq.s32.totalorder %s24, 1
      %p179 = por %p177, %p178
      %p181 = scmp.ne.s32.totalorder %s164, %s180
      %p182 = scmp.eq.s32.totalorder %s24, 0
      %p183 = por %p181, %p182
      %p184 = scmp.le.s32.totalorder 1, %s18
      %p185 = scmp.lt.s32.totalorder %s18, 3
      %p186 = pnand %p184, %p185
      %p187 = pneg %p186
      // Predicated region
      $region9: #{tpu_custom_call.1} parent=5 // pred_check
        _
      $region10: #{tpu_custom_call.1} parent=5 // pred_check_branch
        %189 = sbr.rel (%p186) target = $region12
      $region11: #{tpu_custom_call.1} parent=5 // pred_region
        %s190 = ssub.s32 %s18, 1
        // Predicated region
        $region13: #{tpu_custom_call.1} parent=11 // pred_check
          %p191 = pneg %p82
        $region14: #{tpu_custom_call.1} parent=11 // pred_check_branch
          %193 = sbr.rel (%p191) target = $region16
        $region15: #{tpu_custom_call.1} parent=11 // pred_region
          %195 = vsyncadd [#allocation7], 0
          %s196 = smul.addr %s28, 8
          %s197 = scalar_lea.hbm %s1, %s196
          %s198 = sshll.u32 %s197, 4
          %s199 = int_to_ptr.hbm [resolvable:$true] %s198
          %s200 = sshll.u32 [#allocation6], 4
          %s201 = int_to_ptr.vmem [resolvable:$true] %s200
          %206 = dma.hbm_to_vmem [thread:$0]  %s199, 2048, %s201, [#allocation7], 128, 128, 8
        $region16: #{tpu_custom_call.1} parent=11 // pred_fallthru
          _
        // Predicated region
        $region17: #{tpu_custom_call.1} parent=11 // pred_check
          %p207 = pneg %p103
        $region18: #{tpu_custom_call.1} parent=11 // pred_check_branch
          %209 = sbr.rel (%p207) target = $region20
        $region19: #{tpu_custom_call.1} parent=11 // pred_region
          _
        $region20: #{tpu_custom_call.1} parent=11 // pred_fallthru
          _
        // Predicated region
        $region21: #{tpu_custom_call.1} parent=11 // pred_check
          %p210 = pneg %p129
        $region22: #{tpu_custom_call.1} parent=11 // pred_check_branch
          %212 = sbr.rel (%p210) target = $region24
        $region23: #{tpu_custom_call.1} parent=11 // pred_region
          %s213 = smul.u32 16, %s28
          %215 = vsyncadd [#allocation7], 0
          %s216 = smul.addr %s213, 8
          %s217 = scalar_lea.hbm %s3, %s216
          %s218 = sshll.u32 %s217, 4
          %s219 = int_to_ptr.hbm [resolvable:$true] %s218
          %s220 = sshll.u32 [#allocation8], 4
          %s221 = int_to_ptr.vmem [resolvable:$true] %s220
          %226 = dma.hbm_to_vmem [thread:$0]  %s219, 2048, %s221, [#allocation7], 128, 128, 8
        $region24: #{tpu_custom_call.1} parent=11 // pred_fallthru
          _
        // Predicated region
        $region25: #{tpu_custom_call.1} parent=11 // pred_check
          %p227 = pneg %p150
        $region26: #{tpu_custom_call.1} parent=11 // pred_check_branch
          %229 = sbr.rel (%p227) target = $region28
        $region27: #{tpu_custom_call.1} parent=11 // pred_region
          _
        $region28: #{tpu_custom_call.1} parent=11 // pred_fallthru
          _
      $region12: #{tpu_custom_call.1} parent=5 // pred_fallthru
        _
      %p230 = scmp.lt.s32.totalorder %s18, 2
      // Predicated region
      $region29: #{tpu_custom_call.1} parent=5 // pred_check
        %p231 = pneg %p230
      $region30: #{tpu_custom_call.1} parent=5 // pred_check_branch
        %233 = sbr.rel (%p231) target = $region32
      $region31: #{tpu_custom_call.1} parent=5 // pred_region
        // Predicated region
        $region33: #{tpu_custom_call.1} parent=31 // pred_check
          %p234 = pneg %p50
        $region34: #{tpu_custom_call.1} parent=31 // pred_check_branch
          %236 = sbr.rel (%p234) target = $region36
        $region35: #{tpu_custom_call.1} parent=31 // pred_region
          %s237 = sand.u32 %s40, 1
          %s238 = scalar_lea.sflag [#allocation4], %s237
          %s239 = sand.u32 %s40, 1
          %s240 = smul.addr %s239, 8
          %s241 = scalar_lea.vmem [#allocation3], %s240
          %243 = vsyncadd %s238, 0
          %s244 = smul.addr %s25, 8
          %s245 = scalar_lea.hbm %s0, %s244
          %s247 = sshll.u32 %s245, 4
          %s248 = int_to_ptr.hbm [resolvable:$true] %s247
          %s249 = sshll.u32 %s241, 4
          %s250 = int_to_ptr.vmem [resolvable:$true] %s249
          %252 = dma.hbm_to_vmem [thread:$0]  %s248, 128, %s250, %s238
        $region36: #{tpu_custom_call.1} parent=31 // pred_fallthru
          _
      $region32: #{tpu_custom_call.1} parent=5 // pred_fallthru
        _
      %p253 = scmp.le.s32.totalorder 1, %s18
      %p254 = scmp.lt.s32.totalorder %s18, 3
      %p255 = pnand %p253, %p254
      %p256 = pneg %p255
      // Predicated region
      $region37: #{tpu_custom_call.1} parent=5 // pred_check
        _
      $region38: #{tpu_custom_call.1} parent=5 // pred_check_branch
        %258 = sbr.rel (%p255) target = $region40
      $region39: #{tpu_custom_call.1} parent=5 // pred_region
        %s259 = ssub.s32 %s18, 1
        %s260 = sand.u32 %s43, 1
        %s261 = scalar_lea.sflag [#allocation4], %s260
        %s262 = sand.u32 %s43, 1
        %s263 = smul.addr %s262, 8
        %s264 = scalar_lea.vmem [#allocation3], %s263
        // Predicated region
        $region41: #{tpu_custom_call.1} parent=39 // pred_check
          %p265 = pneg %p56
        $region42: #{tpu_custom_call.1} parent=39 // pred_check_branch
          %267 = sbr.rel (%p265) target = $region44
        $region43: #{tpu_custom_call.1} parent=39 // pred_region
          %269 = dma.done %s261, 128
        $region44: #{tpu_custom_call.1} parent=39 // pred_fallthru
          _
        // Predicated region
        $region45: #{tpu_custom_call.1} parent=39 // pred_check
          %p270 = pneg %p82
        $region46: #{tpu_custom_call.1} parent=39 // pred_check_branch
          %272 = sbr.rel (%p270) target = $region48
        $region47: #{tpu_custom_call.1} parent=39 // pred_region
          %274 = dma.done [#allocation7], 2048
        $region48: #{tpu_custom_call.1} parent=39 // pred_fallthru
          _
        // Predicated region
        $region49: #{tpu_custom_call.1} parent=39 // pred_check
          %p275 = pneg %p129
        $region50: #{tpu_custom_call.1} parent=39 // pred_check_branch
          %277 = sbr.rel (%p275) target = $region52
        $region51: #{tpu_custom_call.1} parent=39 // pred_region
          %279 = dma.done [#allocation7], 2048
        $region52: #{tpu_custom_call.1} parent=39 // pred_fallthru
          _
        %s280 = sand.u32 %s43, 1
        %s281 = scalar_lea.sflag [#allocation4], %s280
        %s282 = sand.u32 %s43, 1
        %s283 = smul.addr %s282, 8
        %s284 = scalar_lea.vmem [#allocation3], %s283
        %p285 = pneg %p56
        %p286 = pneg %p53
        %p287 = pneg %p82
        %p288 = pneg %p79
        %p289 = pneg %p103
        %p290 = pneg %p100
        %p291 = pneg %p129
        %p292 = pneg %p126
        %p293 = pneg %p150
        %p294 = pneg %p147
        %p295 = pneg %p176
        %p296 = pneg %p173
        %s297 = sand.u32 %s163, 1
        %s298 = scalar_lea.sflag [#allocation5], %s297
        %s299 = sand.u32 %s163, 1
        %s300 = smul.addr %s299, 8
        %s301 = scalar_lea.vmem [#allocation9], %s300
        %s302 = smul.u32 16, %s28
        %p303 = scmp.eq.s32.totalorder %s28, 0
        // Predicated region
        $region53: #{tpu_custom_call.1} parent=39 // pred_check
          %p304 = pneg %p303
        $region54: #{tpu_custom_call.1} parent=39 // pred_check_branch
          %306 = sbr.rel (%p304) target = $region56
        $region55: #{tpu_custom_call.1} parent=39 // pred_region
          %307 = vst [vmem:[#allocation2] sm:$0xff] 0.0
        $region56: #{tpu_custom_call.1} parent=39 // pred_fallthru
          _
        %s308 = smul.u32 %s28, 128
        %v309 = vld [vmem:[%s264] sm:$0xff]
        %v310 = vld [vmem:[#allocation6] sm:$0xff]
        %v311 = vld [vmem:[#allocation6 + $0x8] sm:$0xff]
        %v312 = vld [vmem:[#allocation6 + $0x10] sm:$0xff]
        %v313 = vld [vmem:[#allocation6 + $0x18] sm:$0xff]
        %v314 = vld [vmem:[#allocation6 + $0x20] sm:$0xff]
        %v315 = vld [vmem:[#allocation6 + $0x28] sm:$0xff]
        %v316 = vld [vmem:[#allocation6 + $0x30] sm:$0xff]
        %v317 = vld [vmem:[#allocation6 + $0x38] sm:$0xff]
        %v318 = vld [vmem:[#allocation6 + $0x40] sm:$0xff]
        %v319 = vld [vmem:[#allocation6 + $0x48] sm:$0xff]
        %v320 = vld [vmem:[#allocation6 + $0x50] sm:$0xff]
        %v321 = vld [vmem:[#allocation6 + $0x58] sm:$0xff]
        %v322 = vld [vmem:[#allocation6 + $0x60] sm:$0xff]
        %v323 = vld [vmem:[#allocation6 + $0x68] sm:$0xff]
        %v324 = vld [vmem:[#allocation6 + $0x70] sm:$0xff]
        %v325 = vld [vmem:[#allocation6 + $0x78] sm:$0xff]
        %s326 = sshra.s32 %s308, 7
        %s327 = sand.u32 %s308, 127
        %s328 = scalar_lea.vmem %s2, %s326
        %v329 = vld [vmem:[%s328] sm:$0x1]
        %v331 = vperm.slane %v329, 0
        %333 = vmatpush.msra.mxu0 %v325
        %334 = vmatpush.msra.mxu0 %v324
        %335 = vmatpush.msra.mxu0 %v323
        %336 = vmatpush.msra.mxu0 %v322
        %337 = vmatpush.msra.mxu0 %v321
        %338 = vmatpush.msra.mxu0 %v320
        %339 = vmatpush.msra.mxu0 %v319
        %340 = vmatpush.msra.mxu0 %v318
        %341 = vmatpush.msra.mxu0 %v317
        %342 = vmatpush.msra.mxu0 %v316
        %343 = vmatpush.msra.mxu0 %v315
        %344 = vmatpush.msra.mxu0 %v314
        %345 = vmatpush.msra.mxu0 %v313
        %346 = vmatpush.msra.mxu0 %v312
        %347 = vmatpush.msra.mxu0 %v311
        %348 = vmatpush.msra.mxu0 %v310
        %349 = vmatmul.f32.gmra.mxu0 %v309
        %v350 = vpop.f32.mrf.mxu0
        %v351 = vadd.f32 %v331, %v350
        %352 = vdwg.mxu0
        %v353 = vmax.f32 %v351, 0.0
        %v354 = vld [vmem:[#allocation2] sm:$0xff]
        %v355 = vld [vmem:[#allocation8] sm:$0xff]
        %v356 = vld [vmem:[#allocation8 + $0x8] sm:$0xff]
        %v357 = vld [vmem:[#allocation8 + $0x10] sm:$0xff]
        %v358 = vld [vmem:[#allocation8 + $0x18] sm:$0xff]
        %v359 = vld [vmem:[#allocation8 + $0x20] sm:$0xff]
        %v360 = vld [vmem:[#allocation8 + $0x28] sm:$0xff]
        %v361 = vld [vmem:[#allocation8 + $0x30] sm:$0xff]
        %v362 = vld [vmem:[#allocation8 + $0x38] sm:$0xff]
        %v363 = vld [vmem:[#allocation8 + $0x40] sm:$0xff]
        %v364 = vld [vmem:[#allocation8 + $0x48] sm:$0xff]
        %v365 = vld [vmem:[#allocation8 + $0x50] sm:$0xff]
        %v366 = vld [vmem:[#allocation8 + $0x58] sm:$0xff]
        %v367 = vld [vmem:[#allocation8 + $0x60] sm:$0xff]
        %v368 = vld [vmem:[#allocation8 + $0x68] sm:$0xff]
        %v369 = vld [vmem:[#allocation8 + $0x70] sm:$0xff]
        %v370 = vld [vmem:[#allocation8 + $0x78] sm:$0xff]
        %371 = vmatpush.msra.mxu0 %v370
        %372 = vmatpush.msra.mxu0 %v369
        %373 = vmatpush.msra.mxu0 %v368
        %374 = vmatpush.msra.mxu0 %v367
        %375 = vmatpush.msra.mxu0 %v366
        %376 = vmatpush.msra.mxu0 %v365
        %377 = vmatpush.msra.mxu0 %v364
        %378 = vmatpush.msra.mxu0 %v363
        %379 = vmatpush.msra.mxu0 %v362
        %380 = vmatpush.msra.mxu0 %v361
        %381 = vmatpush.msra.mxu0 %v360
        %382 = vmatpush.msra.mxu0 %v359
        %383 = vmatpush.msra.mxu0 %v358
        %384 = vmatpush.msra.mxu0 %v357
        %385 = vmatpush.msra.mxu0 %v356
        %386 = vmatpush.msra.mxu0 %v355
        %387 = vmatmul.f32.gmra.mxu0 %v353
        %v388 = vpop.f32.mrf.mxu0
        %v389 = vadd.f32 0.0, %v388
        %390 = vdwg.mxu0
        %v391 = vadd.f32 %v354, %v389
        %392 = vst [vmem:[#allocation2] sm:$0xff] %v391
        // Predicated region
        $region57: #{tpu_custom_call.1} parent=39 // pred_check
          %p393 = pneg %p303
        $region58: #{tpu_custom_call.1} parent=39 // pred_check_branch
          %395 = sbr.rel (%p393) target = $region60
        $region59: #{tpu_custom_call.1} parent=39 // pred_region
          %v396 = vld [vmem:[#allocation2] sm:$0xff]
          %v397 = vld [vmem:[%s4] sm:$0x1]
          %v399 = vperm.slane %v397, 0
          %v401 = vadd.f32 %v396, %v399
          %402 = vst [vmem:[%s301] sm:$0xff] %v401
        $region60: #{tpu_custom_call.1} parent=39 // pred_fallthru
          _
        %s403 = sand.u32 %s163, 1
        %s404 = scalar_lea.sflag [#allocation5], %s403
        %s405 = sand.u32 %s163, 1
        %s406 = smul.addr %s405, 8
        %s407 = scalar_lea.vmem [#allocation9], %s406
        // Predicated region
        $region61: #{tpu_custom_call.1} parent=39 // pred_check
          %p408 = pneg %p173
        $region62: #{tpu_custom_call.1} parent=39 // pred_check_branch
          %410 = sbr.rel (%p408) target = $region64
        $region63: #{tpu_custom_call.1} parent=39 // pred_region
          %412 = vsyncadd %s404, 0
          %s413 = smul.addr %s27, 8
          %s414 = scalar_lea.hbm %s5, %s413
          %s416 = sshll.u32 %s407, 4
          %s417 = int_to_ptr.vmem [resolvable:$true] %s416
          %s418 = sshll.u32 %s414, 4
          %s419 = int_to_ptr.hbm [resolvable:$true] %s418
          %421 = dma.vmem_to_hbm [thread:$0]  %s417, 128, %s419, %s404
        $region64: #{tpu_custom_call.1} parent=39 // pred_fallthru
          _
      $region40: #{tpu_custom_call.1} parent=5 // pred_fallthru
        _
      %p422 = scmp.le.s32.totalorder 2, %s18
      // Predicated region
      $region65: #{tpu_custom_call.1} parent=5 // pred_check
        %p423 = pneg %p422
      $region66: #{tpu_custom_call.1} parent=5 // pred_check_branch
        %425 = sbr.rel (%p423) target = $region68
      $region67: #{tpu_custom_call.1} parent=5 // pred_region
        %s426 = ssub.s32 %s18, 2
        // Predicated region
        $region69: #{tpu_custom_call.1} parent=67 // pred_check
          %p427 = pneg %p179
        $region70: #{tpu_custom_call.1} parent=67 // pred_check_branch
          %429 = sbr.rel (%p427) target = $region72
        $region71: #{tpu_custom_call.1} parent=67 // pred_region
          %s430 = sand.u32 %s164, 1
          %s431 = scalar_lea.sflag [#allocation5], %s430
          %s432 = sand.u32 %s164, 1
          %s433 = smul.addr %s432, 8
          %s434 = scalar_lea.vmem [#allocation9], %s433
          %436 = dma.done %s431, 128
        $region72: #{tpu_custom_call.1} parent=67 // pred_fallthru
          _
      $region68: #{tpu_custom_call.1} parent=5 // pred_fallthru
        _
    $region6: #{tpu_custom_call.1} parent=1 // loop_footer
      %s22 = sadd.s32 1, %s18
    $region7: #{tpu_custom_call.1} parent=1 // loop_footer_branch
      %17 = sbr.rel target = $region3
    $region8: #{tpu_custom_call.1} parent=1 // loop_exit
      _
    %437 = vsyncpa [#allocation4], 1
    %s438 = scalar_lea.sflag [#allocation4], 1
    %439 = vsyncpa %s438, 1
    %440 = vsyncpa [#allocation7], 1
    %441 = vsyncpa [#allocation5], 1
    %s442 = scalar_lea.sflag [#allocation5], 1
    %443 = vsyncpa %s442, 1

</llo_original>
